<compile_context>
chip_gen: v6e
topology: v6e:2x2x1
jax: 0.10.0
libtpu: 0.0.40
codegen_flags: <defaults>
</compile_context>

<pallas_src>
import jax
import jax.numpy as jnp
from jax.experimental import pallas as pl
from jax.experimental.pallas import tpu as pltpu


_LANES = 128
# Sub-32-bit dtypes pack along sublanes: min tile-row granularity per itemsize.
_SUBLANES_BY_ITEMSIZE = {4: 8, 2: 16, 1: 32}
# 2048 rows x 128 lanes x 4 B = 1 MiB per fp32 tile; with in+out double
# buffering that is ~4 MiB of VMEM — safe on v5e (16 MiB scoped default),
# v6e, and v7x (64 MiB physical), while staying on the tile-size plateau
# (>= 85% of HBM roofline for a pure copy).
_TILE_ROWS = 2048


def _copy_kernel(x_ref, o_ref):
    o_ref[...] = x_ref[...]


def _identity_copy_2d(x2d, tile_rows):
    rows, lanes = x2d.shape
    grid = (pl.cdiv(rows, tile_rows),)
    return pl.pallas_call(
        _copy_kernel,
        out_shape=jax.ShapeDtypeStruct((rows, lanes), x2d.dtype),
        grid=grid,
        in_specs=[pl.BlockSpec((tile_rows, lanes), lambda i: (i, 0))],
        out_specs=pl.BlockSpec((tile_rows, lanes), lambda i: (i, 0)),
        # Donate the input buffer: no second HBM allocation for the output.
        input_output_aliases={0: 0},
        compiler_params=pltpu.CompilerParams(
            dimension_semantics=("parallel",)
        ),
    )(x2d)


def _identity_materialize(x):
    """Materialized identity copy of `x` through the Pallas copy kernel."""
    orig_shape = x.shape
    flat = x.reshape(-1)
    n = flat.shape[0]

    # Lane-aligned prefix goes through the kernel; any sub-128-element tail is
    # handled with a trivial concat (no full-array pad/slice passes).
    n_main = (n // _LANES) * _LANES
    if n_main == 0:
        return x  # tiny array: nothing worth launching a kernel for

    sub = _SUBLANES_BY_ITEMSIZE.get(jnp.dtype(x.dtype).itemsize, 8)
    main = flat if n_main == n else flat[:n_main]
    x2d = main.reshape(-1, _LANES)
    rows = x2d.shape[0]

    # Fixed large dtype-aware tile; ragged last block handled by the cdiv grid.
    tile_rows = min(_TILE_ROWS, ((rows + sub - 1) // sub) * sub)

    out2d = _identity_copy_2d(x2d, tile_rows)
    out_main = out2d.reshape(-1)
    if n_main != n:
        out_flat = jnp.concatenate([out_main, flat[n_main:]])
    else:
        out_flat = out_main
    return out_flat.reshape(orig_shape)


class CheckShape:
    """JAX/Pallas port of the PyTorch CheckShape module.

    remark      : optional string; if set, prints `remark x.shape` (Python glue,
                  fires at trace time under jit — matches the module's intent).
    key         : optional callable applied to x (None -> identity).
    materialize : if True, the identity path produces a fresh buffer via the
                  Pallas copy kernel; if False (default, recommended) the
                  identity path short-circuits and returns x unchanged, which
                  matches `out = x` in the PyTorch forward with zero HBM cost.
    """

    def __init__(self, remark, key=None, materialize=False):
        self.remark = remark
        self.key = key
        self.materialize = materialize

    def __call__(self, x):
        if self.remark is not None:
            print(self.remark, tuple(x.shape))
        if self.key is not None:
            # key is an arbitrary user callable; apply it directly.
            return self.key(x)
        if not self.materialize:
            # Pure pass-through, exactly `out = x` — no kernel launch.
            return x
        return _identity_materialize(x)


if __name__ == "__main__":
    rng = jax.random.PRNGKey(0)
    # Small NCHW input, consistent with a conv-style pipeline this layer sits in.
    x = jax.random.normal(rng, (2, 4, 16, 16), dtype=jnp.float32)

    # Default (recommended) path: short-circuit identity, no kernel.
    module = CheckShape(remark="checkshape", key=None)
    out_fast = module(x)
    out_fast = jax.block_until_ready(out_fast)
    assert out_fast.shape == x.shape and out_fast.dtype == x.dtype
    assert bool(jnp.array_equal(out_fast, x)), "short-circuit identity mismatch"

    # Materialized path: exercises the Pallas copy kernel once.
    module_mat = CheckShape(remark=None, key=None, materialize=True)
    out_mat = module_mat(x)
    out_mat = jax.block_until_ready(out_mat)
    assert out_mat.shape == x.shape and out_mat.dtype == x.dtype
    assert bool(jnp.array_equal(out_mat, x)), "pallas identity copy mismatch"

    print("KERNEL_OK")
</pallas_src>

<mosaic_0001>
module attributes {stable_mosaic.version = 11 : i64} {
  func.func @_copy_kernel(%arg0: i32, %arg1: memref<16x128xf32, #tpu.memory_space<vmem>>, %arg2: memref<16x128xf32, #tpu.memory_space<vmem>>) attributes {dimension_semantics = [#tpu.dimension_semantics<parallel>], iteration_bounds = array<i64: 1>, scalar_prefetch = 0 : i64, scratch_operands = 0 : i64, tpu.core_type = #tpu.core_type<tc>, window_params = [{transform_indices = @transform_0, window_bounds = array<i64: 16, 128>}, {transform_indices = @transform_1, window_bounds = array<i64: 16, 128>}]} {
    %c0 = arith.constant 0 : index
    %c0_0 = arith.constant 0 : index
    %0 = vector.load %arg1[%c0, %c0_0] : memref<16x128xf32, #tpu.memory_space<vmem>>, vector<16x128xf32>
    %c0_1 = arith.constant 0 : index
    %c0_2 = arith.constant 0 : index
    %1 = vector.load %arg2[%c0_1, %c0_2] : memref<16x128xf32, #tpu.memory_space<vmem>>, vector<16x128xf32>
    tpu.vector_store %arg2[%c0_1, %c0_2], %0 {strides = array<i32>} : memref<16x128xf32, #tpu.memory_space<vmem>>, vector<16x128xf32>,
    return
  }
  func.func @transform_0(%arg0: i32) -> (i32, i32) {
    %c0_i32 = arith.constant 0 : i32
    %c0_i32_0 = arith.constant 0 : i32
    return %arg0, %c0_i32 : i32, i32
  }
  func.func @transform_1(%arg0: i32) -> (i32, i32) {
    %c0_i32 = arith.constant 0 : i32
    %c0_i32_0 = arith.constant 0 : i32
    return %arg0, %c0_i32 : i32, i32
  }
}

</mosaic_0001>

<llo_original>
// kernel: tpu_custom_call.1
$region0: #{tpu_custom_call.1}
  #allocation0 [shape = 'u32[]', space=smem, size = 0x4, offset = 0x4, fixed_abs, tag = 'smem constant byte address 0x4 - core index']
  #allocation1 [shape = 'u32[144,128]{1,0:T(1,128)}', space=vmem, size = 0x12000, scoped, tag = 'internal scratch']
  %s0 = inlined_call_operand.hbm [shape: f32[16,128], index: 0, kind: input, shape index: {}, may-alias: {0,1}]
  %s1 = inlined_call_operand.hbm [shape: f32[16,128], index: 1, kind: output, shape index: {}, may-alias: {0,1}]
  %s2 = sld [smem:[#allocation0]]
  $region18: #{tpu_custom_call.1} parent=0
    _
  %s4 = ssub.s32 1, %s2
  %s5 = scalar_select 0, %s4, %s2
  $region1: #{tpu_custom_call.1} parent=0
    #allocation2 [shape = 'u8[8192]{0}', space=vmem, size = 0x2000, scoped, tag = 'input window, operand 0, single buffered']
    #allocation3 [shape = 's32[1]{0}', space=sflag, size = 0x4, scoped, tag = 'scoped memory for tpu_custom_call.1']
    #allocation4 [shape = 's32[1]{0}', space=sflag, size = 0x4, scoped, tag = 'scoped memory for tpu_custom_call.1']
    #allocation5 [shape = 'u8[8192]{0}', space=vmem, size = 0x2000, scoped, tag = 'output window, operand 0, single buffered']
    %6 = vsyncpa [#allocation3], 0
    %7 = vsyncpa [#allocation4], 0
    // Predicated region
    $region2: #{tpu_custom_call.1} parent=1 // pred_check
      _
    $region3: #{tpu_custom_call.1} parent=1 // pred_check_branch
      %9 = sbr.rel (0) target = $region5
    $region4: #{tpu_custom_call.1} parent=1 // pred_region
      %s11 = ssub.s32 256, 256
      %12 = vsyncadd [#allocation3], %s11
      %s13 = sshll.u32 [#allocation2], 4
      %s14 = int_to_ptr.vmem [resolvable:$true] %s13
      %19 = dma.hbm_to_vmem [thread:$0]  %s0, 256, %s14, [#allocation3], 128, 128, 8
    $region5: #{tpu_custom_call.1} parent=1 // pred_fallthru
      _
    // Predicated region
    $region6: #{tpu_custom_call.1} parent=1 // pred_check
      _
    $region7: #{tpu_custom_call.1} parent=1 // pred_check_branch
      %21 = sbr.rel (0) target = $region9
    $region8: #{tpu_custom_call.1} parent=1 // pred_region
      %22 = dma.done [#allocation3], 256
    $region9: #{tpu_custom_call.1} parent=1 // pred_fallthru
      _
    %v23 = vld [vmem:[#allocation2] sm:$0xff]
    %v24 = vld [vmem:[#allocation2 + $0x8] sm:$0xff]
    %25 = vst [vmem:[#allocation5] sm:$0xff] %v23
    %26 = vst [vmem:[#allocation5 + $0x8] sm:$0xff] %v24
    // Predicated region
    $region10: #{tpu_custom_call.1} parent=1 // pred_check
      _
    $region11: #{tpu_custom_call.1} parent=1 // pred_check_branch
      %28 = sbr.rel (0) target = $region13
    $region12: #{tpu_custom_call.1} parent=1 // pred_region
      %s30 = ssub.s32 256, 256
      %31 = vsyncadd [#allocation4], %s30
      %s32 = sshll.u32 [#allocation5], 4
      %s33 = int_to_ptr.vmem [resolvable:$true] %s32
      %38 = dma.vmem_to_hbm [thread:$0]  %s33, 256, %s1, [#allocation4], 128, 128, 8
    $region13: #{tpu_custom_call.1} parent=1 // pred_fallthru
      _
    // Predicated region
    $region14: #{tpu_custom_call.1} parent=1 // pred_check
      _
    $region15: #{tpu_custom_call.1} parent=1 // pred_check_branch
      %40 = sbr.rel (0) target = $region17
    $region16: #{tpu_custom_call.1} parent=1 // pred_region
      %41 = dma.done [#allocation4], 256
    $region17: #{tpu_custom_call.1} parent=1 // pred_fallthru
      _
    %42 = vsyncpa [#allocation3], 1
    %43 = vsyncpa [#allocation4], 1

</llo_original>
